<compile_context>
chip_gen: v7x
topology: tpu7x:2x2x1
jax: 0.10.0
libtpu: 0.0.40
codegen_flags: <defaults>
</compile_context>

<pallas_src>
import jax
import jax.numpy as jnp
from jax.experimental import pallas as pl
from jax.experimental.pallas import tpu as pltpu


def _sigmoid(z):
    # sigmoid(z) = (1 + tanh(z/2)) / 2 : single EUP transcendental, exact.
    return 0.5 + 0.5 * jnp.tanh(0.5 * z)


def mlp_kernel(x_ref, w1_ref, b1_ref, w2_ref, b2_ref, w3_ref, b3_ref, o_ref):
    # x_ref: (TB, 16) batch-major, exactly as stored in HBM.
    x = x_ref[...]

    # layer 1: contract feature dims of (30,16) and (TB,16) -> (30, TB).
    # Folds the x transpose into the MXU pass; batch rides the lane axis.
    h = jnp.einsum("oi,bi->ob", w1_ref[...], x,
                   preferred_element_type=jnp.float32)
    h = _sigmoid(h + b1_ref[...])

    # layer 2: (30,30) @ (30,TB) -> (30,TB)
    h = jnp.dot(w2_ref[...], h, preferred_element_type=jnp.float32)
    h = _sigmoid(h + b2_ref[...])

    # layer 3: (1,30) @ (30,TB) -> (1,TB)   (lane-dense output block)
    h = jnp.dot(w3_ref[...], h, preferred_element_type=jnp.float32)
    o_ref[...] = _sigmoid(h + b3_ref[...]).astype(o_ref.dtype)


def mlp_forward(x, params, *, tb=16384, min_grid=2):
    """x: (B, 16).  params: W:(out,in), b:(out,1) PyTorch-layout tensors.

    Returns (B, 1), matching the PyTorch module's forward.
    """
    w1, b1, w2, b2, w3, b3 = params
    B, in_dim = x.shape
    assert in_dim == 16

    # Batch tile: as large as possible (8K-32K amortizes per-step overhead),
    # multiple of 128, but capped so the parallel batch axis spans at least
    # `min_grid` tiles (v7x has 2 TensorCores; a length-1 grid idles one).
    tb = max(128, (tb // 128) * 128)
    while tb > 128 and pl.cdiv(B, tb) < min_grid:
        tb //= 2
    tb = max(128, (tb // 128) * 128)
    grid = (pl.cdiv(B, tb),)

    # Weights/biases: constant index_maps -> DMA'd once, VMEM-resident across
    # all batch tiles.
    # TODO(synk): pipeline_mode=pl.Buffered(1) on the resident specs (or
    # packing the six tiny params into one slab) would trim a few DMA
    # descriptors / double buffers; minor, kept plain for robustness.
    resident = lambda a: pl.BlockSpec(a.shape, lambda i: (0, 0))

    out = pl.pallas_call(
        mlp_kernel,
        out_shape=jax.ShapeDtypeStruct((1, B), x.dtype),
        grid=grid,
        in_specs=[
            # Natural (B, 16) layout: contiguous DMA, no wrapper pad/transpose.
            pl.BlockSpec((tb, 16), lambda i: (i, 0)),
            resident(w1), resident(b1),
            resident(w2), resident(b2),
            resident(w3), resident(b3),
        ],
        out_specs=pl.BlockSpec((1, tb), lambda i: (0, i)),
        compiler_params=pltpu.CompilerParams(
            dimension_semantics=("parallel",),   # megacore sharding on v7x
        ),
    )(x, w1, b1, w2, b2, w3, b3)

    return out.T   # (B, 1)


def init_linear(key, fan_in, fan_out):
    # Matches torch.nn.Linear default init: U(-1/sqrt(fan_in), 1/sqrt(fan_in))
    # W stored PyTorch-style as (out, in); bias as an (out, 1) column.
    kw, kb = jax.random.split(key)
    bound = 1.0 / jnp.sqrt(fan_in)
    w = jax.random.uniform(kw, (fan_out, fan_in), jnp.float32, -bound, bound)
    b = jax.random.uniform(kb, (fan_out, 1), jnp.float32, -bound, bound)
    return w, b


if __name__ == "__main__":
    key = jax.random.PRNGKey(0)
    kx, k1, k2, k3 = jax.random.split(key, 4)

    # Small demo shape; B deliberately not a multiple of 128 to exercise the
    # ragged-edge masking path.  tb gets capped to 256 -> grid (2,), so the
    # pipelined multi-step path is exercised too.
    B = 300
    x = jax.random.normal(kx, (B, 16), jnp.float32)

    w1, b1 = init_linear(k1, 16, 30)
    w2, b2 = init_linear(k2, 30, 30)
    w3, b3 = init_linear(k3, 30, 1)
    params = (w1, b1, w2, b2, w3, b3)

    out = mlp_forward(x, params)
    out = jax.block_until_ready(out)

    # Reference check in plain JAX (PyTorch layout: y = x @ W.T + b.T).
    ref = jax.nn.sigmoid(
        jax.nn.sigmoid(
            jax.nn.sigmoid(x @ w1.T + b1.T) @ w2.T + b2.T
        ) @ w3.T + b3.T
    )
    assert out.shape == (B, 1)
    # Tanh-form sigmoid is exact (no approx-reciprocal error) -> tight tol.
    assert jnp.allclose(out, ref, atol=1e-4, rtol=1e-4), "mismatch vs reference"

    print("KERNEL_OK")
</pallas_src>

<mosaic_0001>
module attributes {stable_mosaic.version = 11 : i64} {
  func.func @mlp_kernel(%arg0: i32, %arg1: memref<256x16xf32, #tpu.memory_space<vmem>>, %arg2: memref<30x16xf32, #tpu.memory_space<vmem>>, %arg3: memref<30x1xf32, #tpu.memory_space<vmem>>, %arg4: memref<30x30xf32, #tpu.memory_space<vmem>>, %arg5: memref<30x1xf32, #tpu.memory_space<vmem>>, %arg6: memref<1x30xf32, #tpu.memory_space<vmem>>, %arg7: memref<1x1xf32, #tpu.memory_space<vmem>>, %arg8: memref<1x256xf32, #tpu.memory_space<vmem>>) attributes {dimension_semantics = [#tpu.dimension_semantics<parallel>], iteration_bounds = array<i64: 2>, scalar_prefetch = 0 : i64, scratch_operands = 0 : i64, tpu.core_type = #tpu.core_type<tc>, window_params = [{transform_indices = @transform_0, window_bounds = array<i64: 256, 16>}, {pipeline_mode = #tpu.pipeline_mode<synchronous>, transform_indices = @transform_1, window_bounds = array<i64: 30, 16>}, {pipeline_mode = #tpu.pipeline_mode<synchronous>, transform_indices = @transform_2, window_bounds = array<i64: 30, 1>}, {pipeline_mode = #tpu.pipeline_mode<synchronous>, transform_indices = @transform_3, window_bounds = array<i64: 30, 30>}, {pipeline_mode = #tpu.pipeline_mode<synchronous>, transform_indices = @transform_4, window_bounds = array<i64: 30, 1>}, {pipeline_mode = #tpu.pipeline_mode<synchronous>, transform_indices = @transform_5, window_bounds = array<i64: 1, 30>}, {pipeline_mode = #tpu.pipeline_mode<synchronous>, transform_indices = @transform_6, window_bounds = array<i64: 1, 1>}, {transform_indices = @transform_7, window_bounds = array<i64: 1, 256>}]} {
    %c0 = arith.constant 0 : index
    %c0_0 = arith.constant 0 : index
    %0 = vector.load %arg1[%c0, %c0_0] : memref<256x16xf32, #tpu.memory_space<vmem>>, vector<256x16xf32>
    %c0_1 = arith.constant 0 : index
    %c0_2 = arith.constant 0 : index
    %1 = vector.load %arg2[%c0_1, %c0_2] : memref<30x16xf32, #tpu.memory_space<vmem>>, vector<30x16xf32>
    "tpu.trace_start"() <{level = 10 : i32, message = "oi,bi->ob"}> : () -> ()
    %cst = arith.constant dense<0.000000e+00> : vector<30x256xf32>
    %2 = tpu.matmul %1, %0, %cst {dimension_numbers = #tpu.dot_dimension_numbers<[1], [1], [0], [0], [0, 0, 1, 0], [], []>} : vector<30x16xf32>, vector<256x16xf32>, vector<30x256xf32> -> vector<30x256xf32>
    "tpu.trace_stop"() : () -> ()
    %c0_3 = arith.constant 0 : index
    %c0_4 = arith.constant 0 : index
    %3 = vector.load %arg3[%c0_3, %c0_4] : memref<30x1xf32, #tpu.memory_space<vmem>>, vector<30x1xf32>
    %4 = vector.broadcast %3 : vector<30x1xf32> to vector<30x256xf32>
    %5 = arith.addf %2, %4 : vector<30x256xf32>
    %cst_5 = arith.constant 5.000000e-01 : f32
    %6 = vector.broadcast %cst_5 : f32 to vector<30x256xf32>
    %7 = arith.mulf %6, %5 : vector<30x256xf32>
    %8 = math.tanh %7 : vector<30x256xf32>
    %cst_6 = arith.constant 5.000000e-01 : f32
    %9 = vector.broadcast %cst_6 : f32 to vector<30x256xf32>
    %10 = arith.mulf %9, %8 : vector<30x256xf32>
    %cst_7 = arith.constant 5.000000e-01 : f32
    %11 = vector.broadcast %cst_7 : f32 to vector<30x256xf32>
    %12 = arith.addf %11, %10 : vector<30x256xf32>
    %c0_8 = arith.constant 0 : index
    %c0_9 = arith.constant 0 : index
    %13 = vector.load %arg4[%c0_8, %c0_9] : memref<30x30xf32, #tpu.memory_space<vmem>>, vector<30x30xf32>
    %cst_10 = arith.constant dense<0.000000e+00> : vector<30x256xf32>
    %14 = tpu.matmul %13, %12, %cst_10 {dimension_numbers = #tpu.dot_dimension_numbers<[1], [0], [0], [1], [0, 0, 1, 1], [], []>} : vector<30x30xf32>, vector<30x256xf32>, vector<30x256xf32> -> vector<30x256xf32>
    %c0_11 = arith.constant 0 : index
    %c0_12 = arith.constant 0 : index
    %15 = vector.load %arg5[%c0_11, %c0_12] : memref<30x1xf32, #tpu.memory_space<vmem>>, vector<30x1xf32>
    %16 = vector.broadcast %15 : vector<30x1xf32> to vector<30x256xf32>
    %17 = arith.addf %14, %16 : vector<30x256xf32>
    %cst_13 = arith.constant 5.000000e-01 : f32
    %18 = vector.broadcast %cst_13 : f32 to vector<30x256xf32>
    %19 = arith.mulf %18, %17 : vector<30x256xf32>
    %20 = math.tanh %19 : vector<30x256xf32>
    %cst_14 = arith.constant 5.000000e-01 : f32
    %21 = vector.broadcast %cst_14 : f32 to vector<30x256xf32>
    %22 = arith.mulf %21, %20 : vector<30x256xf32>
    %cst_15 = arith.constant 5.000000e-01 : f32
    %23 = vector.broadcast %cst_15 : f32 to vector<30x256xf32>
    %24 = arith.addf %23, %22 : vector<30x256xf32>
    %c0_16 = arith.constant 0 : index
    %c0_17 = arith.constant 0 : index
    %25 = vector.load %arg6[%c0_16, %c0_17] : memref<1x30xf32, #tpu.memory_space<vmem>>, vector<1x30xf32>
    %cst_18 = arith.constant dense<0.000000e+00> : vector<1x256xf32>
    %26 = tpu.matmul %25, %24, %cst_18 {dimension_numbers = #tpu.dot_dimension_numbers<[1], [0], [0], [1], [0, 0, 1, 1], [], []>} : vector<1x30xf32>, vector<30x256xf32>, vector<1x256xf32> -> vector<1x256xf32>
    %c0_19 = arith.constant 0 : index
    %c0_20 = arith.constant 0 : index
    %27 = vector.load %arg7[%c0_19, %c0_20] : memref<1x1xf32, #tpu.memory_space<vmem>>, vector<1x1xf32>
    %28 = vector.broadcast %27 : vector<1x1xf32> to vector<1x256xf32>
    %29 = arith.addf %26, %28 : vector<1x256xf32>
    %cst_21 = arith.constant 5.000000e-01 : f32
    %30 = vector.broadcast %cst_21 : f32 to vector<1x256xf32>
    %31 = arith.mulf %30, %29 : vector<1x256xf32>
    %32 = math.tanh %31 : vector<1x256xf32>
    %cst_22 = arith.constant 5.000000e-01 : f32
    %33 = vector.broadcast %cst_22 : f32 to vector<1x256xf32>
    %34 = arith.mulf %33, %32 : vector<1x256xf32>
    %cst_23 = arith.constant 5.000000e-01 : f32
    %35 = vector.broadcast %cst_23 : f32 to vector<1x256xf32>
    %36 = arith.addf %35, %34 : vector<1x256xf32>
    %c0_24 = arith.constant 0 : index
    %c0_25 = arith.constant 0 : index
    %37 = vector.load %arg8[%c0_24, %c0_25] : memref<1x256xf32, #tpu.memory_space<vmem>>, vector<1x256xf32>
    tpu.vector_store %arg8[%c0_24, %c0_25], %36 {strides = array<i32>} : memref<1x256xf32, #tpu.memory_space<vmem>>, vector<1x256xf32>,
    return
  }
  func.func @transform_0(%arg0: i32) -> (i32, i32) {
    %c0_i32 = arith.constant 0 : i32
    %c0_i32_0 = arith.constant 0 : i32
    return %arg0, %c0_i32 : i32, i32
  }
  func.func @transform_1(%arg0: i32) -> (i32, i32) {
    %c0_i32 = arith.constant 0 : i32
    %c0_i32_0 = arith.constant 0 : i32
    %c0_i32_1 = arith.constant 0 : i32
    return %c0_i32, %c0_i32_0 : i32, i32
  }
  func.func @transform_2(%arg0: i32) -> (i32, i32) {
    %c0_i32 = arith.constant 0 : i32
    %c0_i32_0 = arith.constant 0 : i32
    %c0_i32_1 = arith.constant 0 : i32
    return %c0_i32, %c0_i32_0 : i32, i32
  }
  func.func @transform_3(%arg0: i32) -> (i32, i32) {
    %c0_i32 = arith.constant 0 : i32
    %c0_i32_0 = arith.constant 0 : i32
    %c0_i32_1 = arith.constant 0 : i32
    return %c0_i32, %c0_i32_0 : i32, i32
  }
  func.func @transform_4(%arg0: i32) -> (i32, i32) {
    %c0_i32 = arith.constant 0 : i32
    %c0_i32_0 = arith.constant 0 : i32
    %c0_i32_1 = arith.constant 0 : i32
    return %c0_i32, %c0_i32_0 : i32, i32
  }
  func.func @transform_5(%arg0: i32) -> (i32, i32) {
    %c0_i32 = arith.constant 0 : i32
    %c0_i32_0 = arith.constant 0 : i32
    %c0_i32_1 = arith.constant 0 : i32
    return %c0_i32, %c0_i32_0 : i32, i32
  }
  func.func @transform_6(%arg0: i32) -> (i32, i32) {
    %c0_i32 = arith.constant 0 : i32
    %c0_i32_0 = arith.constant 0 : i32
    %c0_i32_1 = arith.constant 0 : i32
    return %c0_i32, %c0_i32_0 : i32, i32
  }
  func.func @transform_7(%arg0: i32) -> (i32, i32) {
    %c0_i32 = arith.constant 0 : i32
    %c0_i32_0 = arith.constant 0 : i32
    return %c0_i32, %arg0 : i32, i32
  }
}

</mosaic_0001>

<llo_original>
// kernel: tpu_custom_call.1
$region0: #{tpu_custom_call.1}
  #allocation0 [shape = 'u32[]', space=smem, size = 0x4, offset = 0x4, fixed_abs, tag = 'smem constant byte address 0x4 - core index']
  #allocation1 [shape = 'u32[144,128]{1,0:T(1,128)}', space=vmem, size = 0x12000, scoped, tag = 'internal scratch']
  #allocation2 [shape = 'f32[1,1]{1,0:T(1,128)S(1)}', space=vmem, size = 0x200, scoped, tag = 'scoped memory for tpu_custom_call.1']
  %s0 = inlined_call_operand.vmem [shape: f32[300,16], index: 0, kind: input, shape index: {}]
  %s1 = inlined_call_operand.vmem [shape: f32[30,16], index: 1, kind: input, shape index: {}]
  %s2 = inlined_call_operand.vmem [shape: f32[30,1], index: 2, kind: input, shape index: {}]
  %s3 = inlined_call_operand.vmem [shape: f32[30,30], index: 3, kind: input, shape index: {}]
  %s4 = inlined_call_operand.vmem [shape: f32[30,1], index: 4, kind: input, shape index: {}]
  %s5 = inlined_call_operand.vmem [shape: f32[1,30], index: 5, kind: input, shape index: {}]
  %s6 = inlined_call_operand.<no memory space> [shape: f32[1,1], index: 6, kind: input, shape index: {}]
  %s7 = inlined_call_operand.hbm [shape: f32[1,300], index: 7, kind: output, shape index: {}]
  %s8 = sld [smem:[#allocation0]]
  $region61: #{tpu_custom_call.1} parent=0
    _
  %s10 = ssub.s32 1, %s8
  %s11 = scalar_select 0, %s10, %s8
  %v12 = vstv %s6
  %13 = vst [vmem:[#allocation2] sm:$0x1] %v12
  $region1: #{tpu_custom_call.1} parent=0
    #allocation3 [shape = 'u8[2048]{0}', space=vmem, size = 0x800, scoped, tag = 'output window, operand 0']
    #allocation4 [shape = 's32[2]{0}', space=sflag, size = 0x8, scoped, tag = 'scoped memory for tpu_custom_call.1']
    %14 = vsyncpa [#allocation4], 0
    %s15 = scalar_lea.sflag [#allocation4], 1
    %16 = vsyncpa %s15, 0
    loop: start=0, step=1, limit=4
    $region2: #{tpu_custom_call.1} parent=1 // loop_pre_header
      _
    $region3: #{tpu_custom_call.1} parent=1 // loop_header
      %s18 = sphi 0, %s22
      %p19 = scmp.ge.s32.totalorder %s18, 4
      %s28 = sphi 0, %s30
      %s31 = sphi 0, %s28
      %s32 = sphi 0, %s31
      %s48 = sphi 0, %s32
      %s52 = sphi 0, %s52
      %s54 = sphi 0, %s52
      %s55 = sphi 0, %s54
      %s69 = sphi 0, %s55
      %s73 = sphi 0, %s73
      %s75 = sphi 0, %s73
      %s76 = sphi 0, %s75
      %s90 = sphi 0, %s76
      %s94 = sphi 0, %s94
      %s96 = sphi 0, %s94
      %s97 = sphi 0, %s96
      %s111 = sphi 0, %s97
      %s115 = sphi 0, %s115
      %s117 = sphi 0, %s115
      %s118 = sphi 0, %s117
      %s132 = sphi 0, %s118
      %s136 = sphi 0, %s136
      %s138 = sphi 0, %s136
      %s139 = sphi 0, %s138
      %s153 = sphi 0, %s139
      %s157 = sphi 0, %s157
      %s159 = sphi 0, %s157
      %s160 = sphi 0, %s159
      %s174 = sphi 0, %s160
      %s180 = sphi 0, %s182
      %s183 = sphi 0, %s180
      %s184 = sphi 0, %s183
      %s200 = sphi 0, %s184
    $region4: #{tpu_custom_call.1} parent=1 // loop_header_branch
      %21 = sbr.rel (%p19) target = $region8
    $region5: #{tpu_custom_call.1} parent=1 // loop_body
      %s23 = ssub.s32 %s18, 1
      %s24 = ssub.s32 %s18, 2
      %s25 = sadd.s32 %s18, 1
      %s26 = ssub.s32 %s18, %s25
      %p27 = scmp.eq.s32.totalorder %s26, 0
      %s29 = sadd.s32 %s28, 1
      %s30 = scalar_select %p27, %s28, %s29
      %p33 = pneg %p27
      %p34 = scmp.eq.s32.totalorder %s18, 1
      %p35 = por %p33, %p34
      %p36 = scmp.ne.s32.totalorder %s28, %s31
      %p37 = scmp.eq.s32.totalorder %s18, 0
      %p38 = por %p36, %p37
      %p39 = scmp.ne.s32.totalorder %s28, %s31
      %p40 = scmp.eq.s32.totalorder %s23, 1
      %p41 = por %p39, %p40
      %p42 = scmp.ne.s32.totalorder %s31, %s32
      %p43 = scmp.eq.s32.totalorder %s23, 0
      %p44 = por %p42, %p43
      %p45 = scmp.ne.s32.totalorder %s31, %s32
      %p46 = scmp.eq.s32.totalorder %s24, 1
      %p47 = por %p45, %p46
      %p49 = scmp.ne.s32.totalorder %s32, %s48
      %p50 = scmp.eq.s32.totalorder %s24, 0
      %p51 = por %p49, %p50
      %s53 = sadd.s32 %s52, 1
      %p56 = scmp.eq.s32.totalorder %s18, 1
      %p57 = scmp.ne.s32.totalorder %s52, %s54
      %p58 = scmp.eq.s32.totalorder %s18, 0
      %p59 = por %p57, %p58
      %p60 = scmp.ne.s32.totalorder %s52, %s54
      %p61 = scmp.eq.s32.totalorder %s23, 1
      %p62 = por %p60, %p61
      %p63 = scmp.ne.s32.totalorder %s54, %s55
      %p64 = scmp.eq.s32.totalorder %s23, 0
      %p65 = por %p63, %p64
      %p66 = scmp.ne.s32.totalorder %s54, %s55
      %p67 = scmp.eq.s32.totalorder %s24, 1
      %p68 = por %p66, %p67
      %p70 = scmp.ne.s32.totalorder %s55, %s69
      %p71 = scmp.eq.s32.totalorder %s24, 0
      %p72 = por %p70, %p71
      %s74 = sadd.s32 %s73, 1
      %p77 = scmp.eq.s32.totalorder %s18, 1
      %p78 = scmp.ne.s32.totalorder %s73, %s75
      %p79 = scmp.eq.s32.totalorder %s18, 0
      %p80 = por %p78, %p79
      %p81 = scmp.ne.s32.totalorder %s73, %s75
      %p82 = scmp.eq.s32.totalorder %s23, 1
      %p83 = por %p81, %p82
      %p84 = scmp.ne.s32.totalorder %s75, %s76
      %p85 = scmp.eq.s32.totalorder %s23, 0
      %p86 = por %p84, %p85
      %p87 = scmp.ne.s32.totalorder %s75, %s76
      %p88 = scmp.eq.s32.totalorder %s24, 1
      %p89 = por %p87, %p88
      %p91 = scmp.ne.s32.totalorder %s76, %s90
      %p92 = scmp.eq.s32.totalorder %s24, 0
      %p93 = por %p91, %p92
      %s95 = sadd.s32 %s94, 1
      %p98 = scmp.eq.s32.totalorder %s18, 1
      %p99 = scmp.ne.s32.totalorder %s94, %s96
      %p100 = scmp.eq.s32.totalorder %s18, 0
      %p101 = por %p99, %p100
      %p102 = scmp.ne.s32.totalorder %s94, %s96
      %p103 = scmp.eq.s32.totalorder %s23, 1
      %p104 = por %p102, %p103
      %p105 = scmp.ne.s32.totalorder %s96, %s97
      %p106 = scmp.eq.s32.totalorder %s23, 0
      %p107 = por %p105, %p106
      %p108 = scmp.ne.s32.totalorder %s96, %s97
      %p109 = scmp.eq.s32.totalorder %s24, 1
      %p110 = por %p108, %p109
      %p112 = scmp.ne.s32.totalorder %s97, %s111
      %p113 = scmp.eq.s32.totalorder %s24, 0
      %p114 = por %p112, %p113
      %s116 = sadd.s32 %s115, 1
      %p119 = scmp.eq.s32.totalorder %s18, 1
      %p120 = scmp.ne.s32.totalorder %s115, %s117
      %p121 = scmp.eq.s32.totalorder %s18, 0
      %p122 = por %p120, %p121
      %p123 = scmp.ne.s32.totalorder %s115, %s117
      %p124 = scmp.eq.s32.totalorder %s23, 1
      %p125 = por %p123, %p124
      %p126 = scmp.ne.s32.totalorder %s117, %s118
      %p127 = scmp.eq.s32.totalorder %s23, 0
      %p128 = por %p126, %p127
      %p129 = scmp.ne.s32.totalorder %s117, %s118
      %p130 = scmp.eq.s32.totalorder %s24, 1
      %p131 = por %p129, %p130
      %p133 = scmp.ne.s32.totalorder %s118, %s132
      %p134 = scmp.eq.s32.totalorder %s24, 0
      %p135 = por %p133, %p134
      %s137 = sadd.s32 %s136, 1
      %p140 = scmp.eq.s32.totalorder %s18, 1
      %p141 = scmp.ne.s32.totalorder %s136, %s138
      %p142 = scmp.eq.s32.totalorder %s18, 0
      %p143 = por %p141, %p142
      %p144 = scmp.ne.s32.totalorder %s136, %s138
      %p145 = scmp.eq.s32.totalorder %s23, 1
      %p146 = por %p144, %p145
      %p147 = scmp.ne.s32.totalorder %s138, %s139
      %p148 = scmp.eq.s32.totalorder %s23, 0
      %p149 = por %p147, %p148
      %p150 = scmp.ne.s32.totalorder %s138, %s139
      %p151 = scmp.eq.s32.totalorder %s24, 1
      %p152 = por %p150, %p151
      %p154 = scmp.ne.s32.totalorder %s139, %s153
      %p155 = scmp.eq.s32.totalorder %s24, 0
      %p156 = por %p154, %p155
      %s158 = sadd.s32 %s157, 1
      %p161 = scmp.eq.s32.totalorder %s18, 1
      %p162 = scmp.ne.s32.totalorder %s157, %s159
      %p163 = scmp.eq.s32.totalorder %s18, 0
      %p164 = por %p162, %p163
      %p165 = scmp.ne.s32.totalorder %s157, %s159
      %p166 = scmp.eq.s32.totalorder %s23, 1
      %p167 = por %p165, %p166
      %p168 = scmp.ne.s32.totalorder %s159, %s160
      %p169 = scmp.eq.s32.totalorder %s23, 0
      %p170 = por %p168, %p169
      %p171 = scmp.ne.s32.totalorder %s159, %s160
      %p172 = scmp.eq.s32.totalorder %s24, 1
      %p173 = por %p171, %p172
      %p175 = scmp.ne.s32.totalorder %s160, %s174
      %p176 = scmp.eq.s32.totalorder %s24, 0
      %p177 = por %p175, %p176
      %s178 = ssub.s32 %s18, %s25
      %p179 = scmp.eq.s32.totalorder %s178, 0
      %s181 = sadd.s32 %s180, 1
      %s182 = scalar_select %p179, %s180, %s181
      %p185 = pneg %p179
      %p186 = scmp.eq.s32.totalorder %s18, 1
      %p187 = por %p185, %p186
      %p188 = scmp.ne.s32.totalorder %s180, %s183
      %p189 = scmp.eq.s32.totalorder %s18, 0
      %p190 = por %p188, %p189
      %p191 = scmp.ne.s32.totalorder %s180, %s183
      %p192 = scmp.eq.s32.totalorder %s23, 1
      %p193 = por %p191, %p192
      %p194 = scmp.ne.s32.totalorder %s183, %s184
      %p195 = scmp.eq.s32.totalorder %s23, 0
      %p196 = por %p194, %p195
      %p197 = scmp.ne.s32.totalorder %s183, %s184
      %p198 = scmp.eq.s32.totalorder %s24, 1
      %p199 = por %p197, %p198
      %p201 = scmp.ne.s32.totalorder %s184, %s200
      %p202 = scmp.eq.s32.totalorder %s24, 0
      %p203 = por %p201, %p202
      %p204 = scmp.le.s32.totalorder 1, %s18
      %p205 = scmp.lt.s32.totalorder %s18, 3
      %p206 = pnand %p204, %p205
      %p207 = pneg %p206
      // Predicated region
      $region9: #{tpu_custom_call.1} parent=5 // pred_check
        _
      $region10: #{tpu_custom_call.1} parent=5 // pred_check_branch
        %209 = sbr.rel (%p206) target = $region12
      $region11: #{tpu_custom_call.1} parent=5 // pred_region
        %s210 = ssub.s32 %s18, 1
        // Predicated region
        $region13: #{tpu_custom_call.1} parent=11 // pred_check
          %p211 = pneg %p65
        $region14: #{tpu_custom_call.1} parent=11 // pred_check_branch
          %213 = sbr.rel (%p211) target = $region16
        $region15: #{tpu_custom_call.1} parent=11 // pred_region
          _
        $region16: #{tpu_custom_call.1} parent=11 // pred_fallthru
          _
        // Predicated region
        $region17: #{tpu_custom_call.1} parent=11 // pred_check
          %p214 = pneg %p86
        $region18: #{tpu_custom_call.1} parent=11 // pred_check_branch
          %216 = sbr.rel (%p214) target = $region20
        $region19: #{tpu_custom_call.1} parent=11 // pred_region
          _
        $region20: #{tpu_custom_call.1} parent=11 // pred_fallthru
          _
        // Predicated region
        $region21: #{tpu_custom_call.1} parent=11 // pred_check
          %p217 = pneg %p107
        $region22: #{tpu_custom_call.1} parent=11 // pred_check_branch
          %219 = sbr.rel (%p217) target = $region24
        $region23: #{tpu_custom_call.1} parent=11 // pred_region
          _
        $region24: #{tpu_custom_call.1} parent=11 // pred_fallthru
          _
        // Predicated region
        $region25: #{tpu_custom_call.1} parent=11 // pred_check
          %p220 = pneg %p128
        $region26: #{tpu_custom_call.1} parent=11 // pred_check_branch
          %222 = sbr.rel (%p220) target = $region28
        $region27: #{tpu_custom_call.1} parent=11 // pred_region
          _
        $region28: #{tpu_custom_call.1} parent=11 // pred_fallthru
          _
        // Predicated region
        $region29: #{tpu_custom_call.1} parent=11 // pred_check
          %p223 = pneg %p149
        $region30: #{tpu_custom_call.1} parent=11 // pred_check_branch
          %225 = sbr.rel (%p223) target = $region32
        $region31: #{tpu_custom_call.1} parent=11 // pred_region
          _
        $region32: #{tpu_custom_call.1} parent=11 // pred_fallthru
          _
        // Predicated region
        $region33: #{tpu_custom_call.1} parent=11 // pred_check
          %p226 = pneg %p170
        $region34: #{tpu_custom_call.1} parent=11 // pred_check_branch
          %228 = sbr.rel (%p226) target = $region36
        $region35: #{tpu_custom_call.1} parent=11 // pred_region
          _
        $region36: #{tpu_custom_call.1} parent=11 // pred_fallthru
          _
      $region12: #{tpu_custom_call.1} parent=5 // pred_fallthru
        _
      %p229 = scmp.lt.s32.totalorder %s18, 2
      // Predicated region
      $region37: #{tpu_custom_call.1} parent=5 // pred_check
        %p230 = pneg %p229
      $region38: #{tpu_custom_call.1} parent=5 // pred_check_branch
        %232 = sbr.rel (%p230) target = $region40
      $region39: #{tpu_custom_call.1} parent=5 // pred_region
        // Predicated region
        $region41: #{tpu_custom_call.1} parent=39 // pred_check
          %p233 = pneg %p38
        $region42: #{tpu_custom_call.1} parent=39 // pred_check_branch
          %235 = sbr.rel (%p233) target = $region44
        $region43: #{tpu_custom_call.1} parent=39 // pred_region
          %s236 = smul.u32 32, %s18
          %s237 = ssub.s32 38, %s236
          %p238 = scmp.lt.s32.totalorder %s237, 32
          %s239 = scalar_select %p238, %s237, 32
          %s240 = smul.u32 128, %s239
          %p241 = scmp.lt.s32.totalorder %s236, 37
          %s242 = scalar_select %p241, %s236, 37
          %s243 = smul.addr %s242, 8
          %s244 = scalar_lea.vmem %s0, %s243
          %s245 = smul.u32 32, %s18
          %s246 = ssub.s32 38, %s245
          %p247 = scmp.lt.s32.totalorder %s246, 32
          %s248 = scalar_select %p247, %s246, 32
          %s249 = smul.u32 128, %s248
        $region44: #{tpu_custom_call.1} parent=39 // pred_fallthru
          _
      $region40: #{tpu_custom_call.1} parent=5 // pred_fallthru
        _
      %p250 = scmp.le.s32.totalorder 1, %s18
      %p251 = scmp.lt.s32.totalorder %s18, 3
      %p252 = pnand %p250, %p251
      %p253 = pneg %p252
      // Predicated region
      $region45: #{tpu_custom_call.1} parent=5 // pred_check
        _
      $region46: #{tpu_custom_call.1} parent=5 // pred_check_branch
        %255 = sbr.rel (%p252) target = $region48
      $region47: #{tpu_custom_call.1} parent=5 // pred_region
        %s256 = ssub.s32 %s18, 1
        %s257 = smul.u32 32, %s23
        %s258 = ssub.s32 38, %s257
        %p259 = scmp.lt.s32.totalorder %s258, 32
        %s260 = scalar_select %p259, %s258, 32
        %s261 = smul.u32 128, %s260
        %p262 = scmp.lt.s32.totalorder %s257, 37
        %s263 = scalar_select %p262, %s257, 37
        %s264 = smul.addr %s263, 8
        %s265 = scalar_lea.vmem %s0, %s264
        %p266 = pneg %p44
        %p267 = pneg %p41
        %p268 = pneg %p65
        %p269 = pneg %p62
        %p270 = pneg %p86
        %p271 = pneg %p83
        %p272 = pneg %p107
        %p273 = pneg %p104
        %p274 = pneg %p128
        %p275 = pneg %p125
        %p276 = pneg %p149
        %p277 = pneg %p146
        %p278 = pneg %p170
        %p279 = pneg %p167
        %p280 = pneg %p196
        %p281 = pneg %p193
        %s282 = sand.u32 %s183, 1
        %s283 = scalar_lea.sflag [#allocation4], %s282
        %s284 = sand.u32 %s183, 1
        %s285 = smul.addr %s284, 2
        %s286 = scalar_lea.vmem [#allocation3], %s285
        %s287 = smul.u32 32, %s23
        %s288 = ssub.s32 38, %s287
        %p289 = scmp.lt.s32.totalorder %s288, 32
        %s290 = scalar_select %p289, %s288, 32
        %s291 = smul.u32 128, %s290
        %p292 = scmp.lt.s32.totalorder %s287, 37
        %s293 = scalar_select %p292, %s287, 37
        %s294 = smul.addr %s293, 8
        %s295 = scalar_lea.vmem %s0, %s294
        %s296 = smul.u32 32, %s23
        %s297 = ssub.s32 38, %s296
        %p298 = scmp.lt.s32.totalorder %s297, 32
        %s299 = scalar_select %p298, %s297, 32
        %s300 = smul.u32 128, %s299
        %s301 = smul.u32 2, %s23
        %s302 = ssub.s32 3, %s301
        %p303 = scmp.lt.s32.totalorder %s302, 2
        %s304 = scalar_select %p303, %s302, 2
        %s305 = smul.u32 16, %s304
        %v306 = vld [vmem:[%s295] sm:$0xff]
        %v307 = vld [vmem:[%s295 + $0x8] sm:$0xff]
        %v308 = vld [vmem:[%s295 + $0x10] sm:$0xff]
        %v309 = vld [vmem:[%s295 + $0x18] sm:$0xff]
        %v310 = vld [vmem:[%s295 + $0x20] sm:$0xff]
        %v311 = vld [vmem:[%s295 + $0x28] sm:$0xff]
        %v312 = vld [vmem:[%s295 + $0x30] sm:$0xff]
        %v313 = vld [vmem:[%s295 + $0x38] sm:$0xff]
        %v314 = vld [vmem:[%s295 + $0x40] sm:$0xff]
        %v315 = vld [vmem:[%s295 + $0x48] sm:$0xff]
        %v316 = vld [vmem:[%s295 + $0x50] sm:$0xff]
        %v317 = vld [vmem:[%s295 + $0x58] sm:$0xff]
        %v318 = vld [vmem:[%s295 + $0x60] sm:$0xff]
        %v319 = vld [vmem:[%s295 + $0x68] sm:$0xff]
        %v320 = vld [vmem:[%s295 + $0x70] sm:$0xff]
        %v321 = vld [vmem:[%s295 + $0x78] sm:$0xff]
        %v322 = vld [vmem:[%s295 + $0x80] sm:$0xff]
        %v323 = vld [vmem:[%s295 + $0x88] sm:$0xff]
        %v324 = vld [vmem:[%s295 + $0x90] sm:$0xff]
        %v325 = vld [vmem:[%s295 + $0x98] sm:$0xff]
        %v326 = vld [vmem:[%s295 + $0xa0] sm:$0xff]
        %v327 = vld [vmem:[%s295 + $0xa8] sm:$0xff]
        %v328 = vld [vmem:[%s295 + $0xb0] sm:$0xff]
        %v329 = vld [vmem:[%s295 + $0xb8] sm:$0xff]
        %v330 = vld [vmem:[%s295 + $0xc0] sm:$0xff]
        %v331 = vld [vmem:[%s295 + $0xc8] sm:$0xff]
        %v332 = vld [vmem:[%s295 + $0xd0] sm:$0xff]
        %v333 = vld [vmem:[%s295 + $0xd8] sm:$0xff]
        %v334 = vld [vmem:[%s295 + $0xe0] sm:$0xff]
        %v335 = vld [vmem:[%s295 + $0xe8] sm:$0xff]
        %v336 = vld [vmem:[%s295 + $0xf0] sm:$0xff]
        %v337 = vld [vmem:[%s295 + $0xf8] sm:$0xff]
        %v338 = vld [vmem:[%s1] sm:$0xff]
        %v339 = vld [vmem:[%s1 + $0x8] sm:$0xff]
        %v340 = vld [vmem:[%s1 + $0x10] sm:$0xff]
        %v341 = vld [vmem:[%s1 + $0x18] sm:$0x3f]
        %v342 = vld [vmem:[%s2] sm:$0xff]
        %v343 = vld [vmem:[%s2 + $0x8] sm:$0xff]
        %v344 = vld [vmem:[%s2 + $0x10] sm:$0xff]
        %v345 = vld [vmem:[%s2 + $0x18] sm:$0x3f]
        %347 = vset.pattern.permute.xlu0 0
        %348 = vperm.xlu0 %347, %v342
        %v349 = vpop.permute.xlu0 %348
        %352 = vset.pattern.permute.xlu0 0
        %353 = vperm.xlu0 %352, %v343
        %v354 = vpop.permute.xlu0 %353
        %357 = vset.pattern.permute.xlu0 0
        %358 = vperm.xlu0 %357, %v344
        %v359 = vpop.permute.xlu0 %358
        %362 = vset.pattern.permute.xlu0 0
        %363 = vperm.xlu0 %362, %v345
        %v364 = vpop.permute.xlu0 %363
        %vm366 = vcmask 130048
        %v368 = vsel %vm366, %v338, 0
        %v371 = vsel %vm366, %v339, 0
        %v374 = vsel %vm366, %v340, 0
        %v377 = vsel %vm366, %v341, 0
        %v380 = vsel %vm366, %v306, 0
        %v383 = vsel %vm366, %v307, 0
        %v386 = vsel %vm366, %v308, 0
        %v389 = vsel %vm366, %v309, 0
        %v392 = vsel %vm366, %v310, 0
        %v395 = vsel %vm366, %v311, 0
        %v398 = vsel %vm366, %v312, 0
        %v401 = vsel %vm366, %v313, 0
        %v404 = vsel %vm366, %v314, 0
        %v407 = vsel %vm366, %v315, 0
        %v410 = vsel %vm366, %v316, 0
        %v413 = vsel %vm366, %v317, 0
        %v416 = vsel %vm366, %v318, 0
        %v419 = vsel %vm366, %v319, 0
        %v422 = vsel %vm366, %v320, 0
        %v425 = vsel %vm366, %v321, 0
        %v428 = vsel %vm366, %v322, 0
        %v431 = vsel %vm366, %v323, 0
        %v434 = vsel %vm366, %v324, 0
        %v437 = vsel %vm366, %v325, 0
        %v440 = vsel %vm366, %v326, 0
        %v443 = vsel %vm366, %v327, 0
        %v446 = vsel %vm366, %v328, 0
        %v449 = vsel %vm366, %v329, 0
        %v452 = vsel %vm366, %v330, 0
        %v455 = vsel %vm366, %v331, 0
        %v458 = vsel %vm366, %v332, 0
        %v461 = vsel %vm366, %v333, 0
        %v464 = vsel %vm366, %v334, 0
        %v467 = vsel %vm366, %v335, 0
        %v470 = vsel %vm366, %v336, 0
        %v473 = vsel %vm366, %v337, 0
        %475 = vmatprep.subr.mxu0 0.0
        %476 = vmatpush1.xpose.msra.mxu0 %v380
        %477 = vmatprep.subr.mxu0 0.0
        %478 = vmatpush1.xpose.msra.mxu0 %v383
        %479 = vmatprep.subr.mxu0 0.0
        %480 = vmatpush1.xpose.msra.mxu0 %v386
        %481 = vmatprep.subr.mxu0 0.0
        %482 = vmatpush1.xpose.msra.mxu0 %v389
        %483 = vmatprep.subr.mxu0 0.0
        %484 = vmatpush1.xpose.msra.mxu0 %v392
        %485 = vmatprep.subr.mxu0 0.0
        %486 = vmatpush1.xpose.msra.mxu0 %v395
        %487 = vmatprep.subr.mxu0 0.0
        %488 = vmatpush1.xpose.msra.mxu0 %v398
        %489 = vmatprep.subr.mxu0 0.0
        %490 = vmatpush1.xpose.msra.mxu0 %v401
        %491 = vmatprep.subr.mxu0 0.0
        %492 = vmatpush1.xpose.msra.mxu0 %v404
        %493 = vmatprep.subr.mxu0 0.0
        %494 = vmatpush1.xpose.msra.mxu0 %v407
        %495 = vmatprep.subr.mxu0 0.0
        %496 = vmatpush1.xpose.msra.mxu0 %v410
        %497 = vmatprep.subr.mxu0 0.0
        %498 = vmatpush1.xpose.msra.mxu0 %v413
        %499 = vmatprep.subr.mxu0 0.0
        %500 = vmatpush1.xpose.msra.mxu0 %v416
        %501 = vmatprep.subr.mxu0 0.0
        %502 = vmatpush1.xpose.msra.mxu0 %v419
        %503 = vmatprep.subr.mxu0 0.0
        %504 = vmatpush1.xpose.msra.mxu0 %v422
        %505 = vmatprep.subr.mxu0 0.0
        %506 = vmatpush1.xpose.msra.mxu0 %v425
        %507 = vmatprep.subr.mxu0 0.0
        %508 = vmatpush1.xpose.msra.mxu0 %v428
        %509 = vmatprep.subr.mxu0 0.0
        %510 = vmatpush1.xpose.msra.mxu0 %v431
        %511 = vmatprep.subr.mxu0 0.0
        %512 = vmatpush1.xpose.msra.mxu0 %v434
        %513 = vmatprep.subr.mxu0 0.0
        %514 = vmatpush1.xpose.msra.mxu0 %v437
        %515 = vmatprep.subr.mxu0 0.0
        %516 = vmatpush1.xpose.msra.mxu0 %v440
        %517 = vmatprep.subr.mxu0 0.0
        %518 = vmatpush1.xpose.msra.mxu0 %v443
        %519 = vmatprep.subr.mxu0 0.0
        %520 = vmatpush1.xpose.msra.mxu0 %v446
        %521 = vmatprep.subr.mxu0 0.0
        %522 = vmatpush1.xpose.msra.mxu0 %v449
        %523 = vmatprep.subr.mxu0 0.0
        %524 = vmatpush1.xpose.msra.mxu0 %v452
        %525 = vmatprep.subr.mxu0 0.0
        %526 = vmatpush1.xpose.msra.mxu0 %v455
        %527 = vmatprep.subr.mxu0 0.0
        %528 = vmatpush1.xpose.msra.mxu0 %v458
        %529 = vmatprep.subr.mxu0 0.0
        %530 = vmatpush1.xpose.msra.mxu0 %v461
        %531 = vmatprep.subr.mxu0 0.0
        %532 = vmatpush1.xpose.msra.mxu0 %v464
        %533 = vmatprep.subr.mxu0 0.0
        %534 = vmatpush1.xpose.msra.mxu0 %v467
        %535 = vmatprep.subr.mxu0 0.0
        %536 = vmatpush1.xpose.msra.mxu0 %v470
        %537 = vmatprep.subr.mxu0 0.0
        %538 = vmatpush1.xpose.msra.mxu0 %v473
        %539 = vmatprep.mubr.f32.mxu0 0.0
        %540 = vmatmul.mubr.f32.gmra.mrb[0].mxu0 %v368
        %v541 = vpop.f32.mrb[0].mxu0
        %v542 = vadd.f32 %v349, %v541
        %v543 = vpop.f32.mrb[0].mxu0
        %v544 = vadd.f32 %v349, %v543
        %545 = vmatprep.mubr.f32.mxu0 0.0
        %546 = vmatmul.mubr.f32.gmra.mrb[0].mxu0 %v371
        %v547 = vpop.f32.mrb[0].mxu0
        %v548 = vadd.f32 %v354, %v547
        %v549 = vpop.f32.mrb[0].mxu0
        %v550 = vadd.f32 %v354, %v549
        %551 = vmatprep.mubr.f32.mxu0 0.0
        %552 = vmatmul.mubr.f32.gmra.mrb[0].mxu0 %v374
        %v553 = vpop.f32.mrb[0].mxu0
        %v554 = vadd.f32 %v359, %v553
        %v555 = vpop.f32.mrb[0].mxu0
        %v556 = vadd.f32 %v359, %v555
        %557 = vmatprep.mubr.f32.mxu0 0.0
        %558 = vmatmul.mubr.f32.gmra.mrb[0].mxu0 %v377
        %v559 = vpop.f32.mrb[0].mxu0
        %v560 = vadd.f32 %v364, %v559
        %v561 = vpop.f32.mrb[0].mxu0
        %v562 = vadd.f32 %v364, %v561
        %563 = vdwg.mxu0
        %v564 = vmul.f32 %v542, 0.5
        %v565 = vmul.f32 %v544, 0.5
        %v566 = vmul.f32 %v548, 0.5
        %v567 = vmul.f32 %v550, 0.5
        %v568 = vmul.f32 %v554, 0.5
        %v569 = vmul.f32 %v556, 0.5
        %v570 = vmul.f32 %v560, 0.5
        %v571 = vmul.f32 %v562, 0.5
        %v572 = vtanh.pop %v564
        %v573 = vtanh.pop %v565
        %v574 = vtanh.pop %v566
        %v575 = vtanh.pop %v567
        %v576 = vtanh.pop %v568
        %v577 = vtanh.pop %v569
        %v578 = vtanh.pop %v570
        %v579 = vtanh.pop %v571
        %v580 = vmul.f32 %v572, 0.5
        %v581 = vmul.f32 %v573, 0.5
        %v582 = vmul.f32 %v574, 0.5
        %v583 = vmul.f32 %v575, 0.5
        %v584 = vmul.f32 %v576, 0.5
        %v585 = vmul.f32 %v577, 0.5
        %v586 = vmul.f32 %v578, 0.5
        %v587 = vmul.f32 %v579, 0.5
        %v588 = vadd.f32 %v580, 0.5
        %v589 = vadd.f32 %v581, 0.5
        %v590 = vadd.f32 %v582, 0.5
        %v591 = vadd.f32 %v583, 0.5
        %v592 = vadd.f32 %v584, 0.5
        %v593 = vadd.f32 %v585, 0.5
        %v594 = vadd.f32 %v586, 0.5
        %v595 = vadd.f32 %v587, 0.5
        %v596 = vld [vmem:[%s3] sm:$0xff]
        %v597 = vld [vmem:[%s3 + $0x8] sm:$0xff]
        %v598 = vld [vmem:[%s3 + $0x10] sm:$0xff]
        %v599 = vld [vmem:[%s3 + $0x18] sm:$0x3f]
        %v600 = vld [vmem:[%s4] sm:$0xff]
        %v601 = vld [vmem:[%s4 + $0x8] sm:$0xff]
        %v602 = vld [vmem:[%s4 + $0x10] sm:$0xff]
        %v603 = vld [vmem:[%s4 + $0x18] sm:$0x3f]
        %605 = vset.pattern.permute.xlu0 0
        %606 = vperm.xlu0 %605, %v600
        %v607 = vpop.permute.xlu0 %606
        %610 = vset.pattern.permute.xlu0 0
        %611 = vperm.xlu0 %610, %v601
        %v612 = vpop.permute.xlu0 %611
        %615 = vset.pattern.permute.xlu0 0
        %616 = vperm.xlu0 %615, %v602
        %v617 = vpop.permute.xlu0 %616
        %620 = vset.pattern.permute.xlu0 0
        %621 = vperm.xlu0 %620, %v603
        %v622 = vpop.permute.xlu0 %621
        %vm624 = vcmask 244736
        %v626 = vsel %vm624, %v596, 0
        %v629 = vsel %vm624, %v597, 0
        %v632 = vsel %vm624, %v598, 0
        %v635 = vsel %vm624, %v599, 0
        %vm637 = vcmask 1045504
        %v639 = vsel %vm637, %v594, 0
        %v642 = vsel %vm637, %v595, 0
        %644 = vmatprep.subr.mxu0 %v589
        %645 = vmatpush1.msra.mxu0 %v588
        %646 = vmatprep.subr.mxu0 %v591
        %647 = vmatpush1.msra.mxu0 %v590
        %648 = vmatprep.subr.mxu0 %v593
        %649 = vmatpush1.msra.mxu0 %v592
        %650 = vmatprep.subr.mxu0 %v642
        %651 = vmatpush1.msra.mxu0 %v639
        %652 = vmatprep.subr.mxu0 0.0
        %653 = vmatpush1.msra.mxu0 0.0
        %654 = vmatprep.subr.mxu0 0.0
        %655 = vmatpush1.msra.mxu0 0.0
        %656 = vmatprep.subr.mxu0 0.0
        %657 = vmatpush1.msra.mxu0 0.0
        %658 = vmatprep.subr.mxu0 0.0
        %659 = vmatpush1.msra.mxu0 0.0
        %660 = vmatprep.subr.mxu0 0.0
        %661 = vmatpush1.msra.mxu0 0.0
        %662 = vmatprep.subr.mxu0 0.0
        %663 = vmatpush1.msra.mxu0 0.0
        %664 = vmatprep.subr.mxu0 0.0
        %665 = vmatpush1.msra.mxu0 0.0
        %666 = vmatprep.subr.mxu0 0.0
        %667 = vmatpush1.msra.mxu0 0.0
        %668 = vmatprep.subr.mxu0 0.0
        %669 = vmatpush1.msra.mxu0 0.0
        %670 = vmatprep.subr.mxu0 0.0
        %671 = vmatpush1.msra.mxu0 0.0
        %672 = vmatprep.subr.mxu0 0.0
        %673 = vmatpush1.msra.mxu0 0.0
        %674 = vmatprep.subr.mxu0 0.0
        %675 = vmatpush1.msra.mxu0 0.0
        %676 = vmatprep.subr.mxu0 0.0
        %677 = vmatpush1.msra.mxu0 0.0
        %678 = vmatprep.subr.mxu0 0.0
        %679 = vmatpush1.msra.mxu0 0.0
        %680 = vmatprep.subr.mxu0 0.0
        %681 = vmatpush1.msra.mxu0 0.0
        %682 = vmatprep.subr.mxu0 0.0
        %683 = vmatpush1.msra.mxu0 0.0
        %684 = vmatprep.subr.mxu0 0.0
        %685 = vmatpush1.msra.mxu0 0.0
        %686 = vmatprep.subr.mxu0 0.0
        %687 = vmatpush1.msra.mxu0 0.0
        %688 = vmatprep.subr.mxu0 0.0
        %689 = vmatpush1.msra.mxu0 0.0
        %690 = vmatprep.subr.mxu0 0.0
        %691 = vmatpush1.msra.mxu0 0.0
        %692 = vmatprep.subr.mxu0 0.0
        %693 = vmatpush1.msra.mxu0 0.0
        %694 = vmatprep.subr.mxu0 0.0
        %695 = vmatpush1.msra.mxu0 0.0
        %696 = vmatprep.subr.mxu0 0.0
        %697 = vmatpush1.msra.mxu0 0.0
        %698 = vmatprep.subr.mxu0 0.0
        %699 = vmatpush1.msra.mxu0 0.0
        %700 = vmatprep.subr.mxu0 0.0
        %701 = vmatpush1.msra.mxu0 0.0
        %702 = vmatprep.subr.mxu0 0.0
        %703 = vmatpush1.msra.mxu0 0.0
        %704 = vmatprep.subr.mxu0 0.0
        %705 = vmatpush1.msra.mxu0 0.0
        %706 = vmatprep.subr.mxu0 0.0
        %707 = vmatpush1.msra.mxu0 0.0
        %708 = vmatprep.mubr.f32.mxu0 0.0
        %709 = vmatmul.mubr.f32.gmra.mrb[0].mxu0 %v626
        %v710 = vpop.f32.mrb[0].mxu0
        %v711 = vadd.f32 %v607, %v710
        %v712 = vpop.f32.mrb[0].mxu0
        %v713 = vadd.f32 %v607, %v712
        %714 = vmatprep.mubr.f32.mxu0 0.0
        %715 = vmatmul.mubr.f32.gmra.mrb[0].mxu0 %v629
        %v716 = vpop.f32.mrb[0].mxu0
        %v717 = vadd.f32 %v612, %v716
        %v718 = vpop.f32.mrb[0].mxu0
        %v719 = vadd.f32 %v612, %v718
        %720 = vmatprep.mubr.f32.mxu0 0.0
        %721 = vmatmul.mubr.f32.gmra.mrb[0].mxu0 %v632
        %v722 = vpop.f32.mrb[0].mxu0
        %v723 = vadd.f32 %v617, %v722
        %v724 = vpop.f32.mrb[0].mxu0
        %v725 = vadd.f32 %v617, %v724
        %726 = vmatprep.mubr.f32.mxu0 0.0
        %727 = vmatmul.mubr.f32.gmra.mrb[0].mxu0 %v635
        %v728 = vpop.f32.mrb[0].mxu0
        %v729 = vadd.f32 %v622, %v728
        %v730 = vpop.f32.mrb[0].mxu0
        %v731 = vadd.f32 %v622, %v730
        %732 = vdwg.mxu0
        %v733 = vmul.f32 %v711, 0.5
        %v734 = vmul.f32 %v713, 0.5
        %v735 = vmul.f32 %v717, 0.5
        %v736 = vmul.f32 %v719, 0.5
        %v737 = vmul.f32 %v723, 0.5
        %v738 = vmul.f32 %v725, 0.5
        %v739 = vmul.f32 %v729, 0.5
        %v740 = vmul.f32 %v731, 0.5
        %v741 = vtanh.pop %v733
        %v742 = vtanh.pop %v734
        %v743 = vtanh.pop %v735
        %v744 = vtanh.pop %v736
        %v745 = vtanh.pop %v737
        %v746 = vtanh.pop %v738
        %v747 = vtanh.pop %v739
        %v748 = vtanh.pop %v740
        %v749 = vmul.f32 %v741, 0.5
        %v750 = vmul.f32 %v742, 0.5
        %v751 = vmul.f32 %v743, 0.5
        %v752 = vmul.f32 %v744, 0.5
        %v753 = vmul.f32 %v745, 0.5
        %v754 = vmul.f32 %v746, 0.5
        %v755 = vmul.f32 %v747, 0.5
        %v756 = vmul.f32 %v748, 0.5
        %v757 = vadd.f32 %v749, 0.5
        %v758 = vadd.f32 %v750, 0.5
        %v759 = vadd.f32 %v751, 0.5
        %v760 = vadd.f32 %v752, 0.5
        %v761 = vadd.f32 %v753, 0.5
        %v762 = vadd.f32 %v754, 0.5
        %v763 = vadd.f32 %v755, 0.5
        %v764 = vadd.f32 %v756, 0.5
        %v765 = vld [vmem:[%s5] sm:$0x1]
        %v766 = vld [vmem:[#allocation2] sm:$0x1]
        %768 = vset.pattern.permute.xlu0 0
        %769 = vperm.xlu0 %768, %v766
        %v770 = vpop.permute.xlu0 %769
        %v772 = vlaneseq
        %v773 = vshrl.u32 %v772, 7
        %v774 = vsub.s32 0, %v773
        %v775 = vrot.slane %v770, %v774
        %v777 = vsel %vm624, %v765, 0
        %v780 = vsel %vm637, %v763, 0
        %v783 = vsel %vm637, %v764, 0
        %785 = vmatprep.subr.mxu0 %v758
        %786 = vmatpush1.msra.mxu0 %v757
        %787 = vmatprep.subr.mxu0 %v760
        %788 = vmatpush1.msra.mxu0 %v759
        %789 = vmatprep.subr.mxu0 %v762
        %790 = vmatpush1.msra.mxu0 %v761
        %791 = vmatprep.subr.mxu0 %v783
        %792 = vmatpush1.msra.mxu0 %v780
        %793 = vmatprep.subr.mxu0 0.0
        %794 = vmatpush1.msra.mxu0 0.0
        %795 = vmatprep.subr.mxu0 0.0
        %796 = vmatpush1.msra.mxu0 0.0
        %797 = vmatprep.subr.mxu0 0.0
        %798 = vmatpush1.msra.mxu0 0.0
        %799 = vmatprep.subr.mxu0 0.0
        %800 = vmatpush1.msra.mxu0 0.0
        %801 = vmatprep.subr.mxu0 0.0
        %802 = vmatpush1.msra.mxu0 0.0
        %803 = vmatprep.subr.mxu0 0.0
        %804 = vmatpush1.msra.mxu0 0.0
        %805 = vmatprep.subr.mxu0 0.0
        %806 = vmatpush1.msra.mxu0 0.0
        %807 = vmatprep.subr.mxu0 0.0
        %808 = vmatpush1.msra.mxu0 0.0
        %809 = vmatprep.subr.mxu0 0.0
        %810 = vmatpush1.msra.mxu0 0.0
        %811 = vmatprep.subr.mxu0 0.0
        %812 = vmatpush1.msra.mxu0 0.0
        %813 = vmatprep.subr.mxu0 0.0
        %814 = vmatpush1.msra.mxu0 0.0
        %815 = vmatprep.subr.mxu0 0.0
        %816 = vmatpush1.msra.mxu0 0.0
        %817 = vmatprep.subr.mxu0 0.0
        %818 = vmatpush1.msra.mxu0 0.0
        %819 = vmatprep.subr.mxu0 0.0
        %820 = vmatpush1.msra.mxu0 0.0
        %821 = vmatprep.subr.mxu0 0.0
        %822 = vmatpush1.msra.mxu0 0.0
        %823 = vmatprep.subr.mxu0 0.0
        %824 = vmatpush1.msra.mxu0 0.0
        %825 = vmatprep.subr.mxu0 0.0
        %826 = vmatpush1.msra.mxu0 0.0
        %827 = vmatprep.subr.mxu0 0.0
        %828 = vmatpush1.msra.mxu0 0.0
        %829 = vmatprep.subr.mxu0 0.0
        %830 = vmatpush1.msra.mxu0 0.0
        %831 = vmatprep.subr.mxu0 0.0
        %832 = vmatpush1.msra.mxu0 0.0
        %833 = vmatprep.subr.mxu0 0.0
        %834 = vmatpush1.msra.mxu0 0.0
        %835 = vmatprep.subr.mxu0 0.0
        %836 = vmatpush1.msra.mxu0 0.0
        %837 = vmatprep.subr.mxu0 0.0
        %838 = vmatpush1.msra.mxu0 0.0
        %839 = vmatprep.subr.mxu0 0.0
        %840 = vmatpush1.msra.mxu0 0.0
        %841 = vmatprep.subr.mxu0 0.0
        %842 = vmatpush1.msra.mxu0 0.0
        %843 = vmatprep.subr.mxu0 0.0
        %844 = vmatpush1.msra.mxu0 0.0
        %845 = vmatprep.subr.mxu0 0.0
        %846 = vmatpush1.msra.mxu0 0.0
        %847 = vmatprep.subr.mxu0 0.0
        %848 = vmatpush1.msra.mxu0 0.0
        %849 = vmatprep.mubr.f32.mxu0 0.0
        %850 = vmatmul.mubr.f32.gmra.mrb[0].mxu0 %v777
        %v851 = vpop.f32.mrb[0].mxu0
        %v852 = vadd.f32 %v775, %v851
        %v853 = vpop.f32.mrb[0].mxu0
        %v854 = vadd.f32 %v775, %v853
        %855 = vdwg.mxu0
        %v856 = vmul.f32 %v852, 0.5
        %v857 = vmul.f32 %v854, 0.5
        %v858 = vtanh.pop %v856
        %v859 = vtanh.pop %v857
        %v860 = vmul.f32 %v858, 0.5
        %v861 = vmul.f32 %v859, 0.5
        %v862 = vadd.f32 %v860, 0.5
        %v863 = vadd.f32 %v861, 0.5
        %v866 = vcombine.low %v862, %v863
        %v868 = vunpack.c.l.s4 1966171168
        %v869 = vunpack.c.0.s8 %v868
        %v870 = vlaneseq
        %v871 = vshrl.u32 %v870, 7
        %v872 = vsub.s32 %v869, %v871
        %v873 = vrot.slane %v866, %v872
        %v875 = vunpack.c.l.s4 1966171168
        %v876 = vunpack.c.0.s8 %v875
        %v877 = vlaneseq
        %v878 = vshrl.u32 %v877, 7
        %v879 = vsub.s32 %v876, %v878
        %v880 = vrot.slane %v873, %v879
        %v882 = vlaneseq
        %vm883 = vcmp.ge.s32.totalorder %v882, 0
        %vm884 = vcmp.lt.s32.totalorder %v882, 256
        %vm885 = vmand %vm883, %vm884
        %886 = vst.msk [vmem:[%s286] sm:$0x3] %vm885, %v880
        %s887 = sand.u32 %s183, 1
        %s888 = scalar_lea.sflag [#allocation4], %s887
        %s889 = sand.u32 %s183, 1
        %s890 = smul.addr %s889, 2
        %s891 = scalar_lea.vmem [#allocation3], %s890
        // Predicated region
        $region49: #{tpu_custom_call.1} parent=47 // pred_check
          %p892 = pneg %p193
        $region50: #{tpu_custom_call.1} parent=47 // pred_check_branch
          %894 = sbr.rel (%p892) target = $region52
        $region51: #{tpu_custom_call.1} parent=47 // pred_region
          %s895 = smul.u32 2, %s23
          %s896 = ssub.s32 3, %s895
          %p897 = scmp.lt.s32.totalorder %s896, 2
          %s898 = scalar_select %p897, %s896, 2
          %s899 = smul.u32 16, %s898
          %s901 = ssub.s32 32, %s899
          %902 = vsyncadd %s888, %s901
          %p903 = scmp.ne.s32.totalorder 0, %s899
          %s904 = smul.addr %s895, 16
          %s905 = scalar_lea.hbm %s7, %s904
          %s906 = sshll.u32 %s898, 4
          %s907 = sshll.u32 %s891, 4
          %s908 = int_to_ptr.vmem [resolvable:$true] %s907
          %910 = dma.vmem_to_hbm [thread:$0]  (%p903), %s908, %s906, %s905, %s888
        $region52: #{tpu_custom_call.1} parent=47 // pred_fallthru
          _
      $region48: #{tpu_custom_call.1} parent=5 // pred_fallthru
        _
      %p911 = scmp.le.s32.totalorder 2, %s18
      // Predicated region
      $region53: #{tpu_custom_call.1} parent=5 // pred_check
        %p912 = pneg %p911
      $region54: #{tpu_custom_call.1} parent=5 // pred_check_branch
        %914 = sbr.rel (%p912) target = $region56
      $region55: #{tpu_custom_call.1} parent=5 // pred_region
        %s915 = ssub.s32 %s18, 2
        // Predicated region
        $region57: #{tpu_custom_call.1} parent=55 // pred_check
          %p916 = pneg %p199
        $region58: #{tpu_custom_call.1} parent=55 // pred_check_branch
          %918 = sbr.rel (%p916) target = $region60
        $region59: #{tpu_custom_call.1} parent=55 // pred_region
          %s919 = sand.u32 %s184, 1
          %s920 = scalar_lea.sflag [#allocation4], %s919
          %s921 = sand.u32 %s184, 1
          %s922 = smul.addr %s921, 2
          %s923 = scalar_lea.vmem [#allocation3], %s922
          %924 = dma.done %s920, 32
        $region60: #{tpu_custom_call.1} parent=55 // pred_fallthru
          _
      $region56: #{tpu_custom_call.1} parent=5 // pred_fallthru
        _
    $region6: #{tpu_custom_call.1} parent=1 // loop_footer
      %s22 = sadd.s32 1, %s18
    $region7: #{tpu_custom_call.1} parent=1 // loop_footer_branch
      %17 = sbr.rel target = $region3
    $region8: #{tpu_custom_call.1} parent=1 // loop_exit
      _
    %925 = vsyncpa [#allocation4], 1
    %s926 = scalar_lea.sflag [#allocation4], 1
    %927 = vsyncpa %s926, 1

</llo_original>
